<compile_context>
chip_gen: v7x
topology: tpu7x:2x2x1
jax: 0.10.0
libtpu: 0.0.40
codegen_flags: <defaults>
</compile_context>

<pallas_src>
import functools

import jax
import jax.numpy as jnp
from jax.experimental import pallas as pl
from jax.experimental.pallas import tpu as pltpu


# ----------------------------------------------------------------------------
# Pallas kernel
# ----------------------------------------------------------------------------
def _rem_nam_logit_kernel(n_layers, x_ref, *refs):
    """x_ref: [2F, TB] (events rows 0..F-1, non_events rows F..2F-1, batch on lanes)."""
    *param_refs, out_ref = refs

    h = x_ref[...]                                               # f32 [2F, TB]
    for k in range(n_layers):
        w = param_refs[2 * k][...]                               # [rows_out, rows_in]
        b = param_refs[2 * k + 1][...]                           # [rows_out, 1] f32
        h = jnp.dot(w, h.astype(w.dtype),
                    preferred_element_type=jnp.float32)          # [rows_out, TB]
        h = jnp.maximum(h + b, 0.0)

    # Fused output layer + feature sum + (events - non_events): the output weight row is
    # [+wout_flat, -wout_flat], so one lane-dense [1, TB] dot gives the logit directly.
    wout = param_refs[2 * n_layers][...]                         # [1, rows_last]
    s = jnp.dot(wout, h.astype(wout.dtype),
                preferred_element_type=jnp.float32)              # [1, TB]
    out_ref[...] = jax.nn.sigmoid(s)


# ----------------------------------------------------------------------------
# Weight folding (done once in the wrapper)
# ----------------------------------------------------------------------------
def _block_diag2(m):
    """[[m, 0], [0, m]] - one block per branch (events / non_events)."""
    z = jnp.zeros_like(m)
    return jnp.concatenate(
        [jnp.concatenate([m, z], axis=1),
         jnp.concatenate([z, m], axis=1)], axis=0)


def flatten_nam_params(params, param_dtype=jnp.bfloat16):
    """Fold per-feature NAM nets into transposed block-diagonal matrices.

    Output layout matches the batch-on-lanes kernel: activations are
    [branch*F*width, batch] and every layer is a single `W @ h` matmul.
    """
    w1, b1, hidden, wout, bout = params
    del bout  # exact: cancels in the (events - non_events) subtraction
    F, U = w1.shape
    eye = jnp.eye(F, dtype=jnp.float32)

    # Layer 1 (scalar per feature -> U units), transposed & feature-block-diagonal:
    #   W1t[f*U + u, g] = (f == g) * w1[f, u]
    w1t = (eye[:, None, :] * w1[:, :, None]).reshape(F * U, F)
    b1t = b1.reshape(F * U, 1)
    flat = [_block_diag2(w1t).astype(param_dtype),
            jnp.concatenate([b1t, b1t], axis=0).astype(jnp.float32)]

    # Hidden layers: Wkt[f*H + h, g*Hp + p] = (f == g) * wk[f, p, h]
    for wk, bk in hidden:
        _, hp, hh = wk.shape
        wkt = (eye[:, None, :, None] *
               jnp.transpose(wk, (0, 2, 1))[:, :, None, :]).reshape(F * hh, F * hp)
        bkt = bk.reshape(F * hh, 1)
        flat += [_block_diag2(wkt).astype(param_dtype),
                 jnp.concatenate([bkt, bkt], axis=0).astype(jnp.float32)]

    # Output row: [+wout_flat, -wout_flat]  -> (sum_f c_ev) - (sum_f c_nev)
    wflat = wout.reshape(1, -1)
    flat.append(jnp.concatenate([wflat, -wflat], axis=1).astype(param_dtype))
    return flat


# ----------------------------------------------------------------------------
# Tiling / wrapper
# ----------------------------------------------------------------------------
_MAX_TILE_B = 8192  # [128, 8192] f32 activations ~4 MiB each -> well inside VMEM


def _num_tensorcores():
    try:
        return max(1, int(getattr(jax.devices()[0], "num_cores", 1) or 1))
    except Exception:  # pragma: no cover - best-effort detection only
        return 1


def _pick_tile_b(B, num_cores, max_tile=_MAX_TILE_B):
    # One balanced, lane-dense step per TensorCore (v7x: 2 steps); otherwise a single
    # grid step (v5e/v6e, 1 TC) up to the VMEM-safe cap. Per-step work here is tiny,
    # so fewer grid steps amortize the ~0.35 us fixed pipeline overhead.
    if num_cores > 1 and B % num_cores == 0:
        per_core = B // num_cores
        if per_core % 128 == 0 and per_core <= max_tile:
            return per_core
    if B <= max_tile:
        return B
    # B too large for one step: largest lane-dense divisor of B below the cap.
    for t in range(max_tile - max_tile % 128, 127, -128):
        if B % t == 0:
            return t
    for t in range(max_tile - max_tile % 8, 7, -8):
        if B % t == 0:
            return t
    return B  # pathological B (huge prime): single step, still correct


def rem_nam_logit(events, non_events, params, *, tile_b=None,
                  param_dtype=jnp.bfloat16, num_cores=None):
    """events, non_events: [B, F] float32 -> [B] float32."""
    B, F = events.shape
    if num_cores is None:
        num_cores = _num_tensorcores()
    if tile_b is None:
        tile_b = _pick_tile_b(B, num_cores)
    assert B % tile_b == 0
    assert tile_b == B or tile_b % 128 == 0, "batch tiles must be lane-dense (x128)"
    num_tiles = B // tile_b

    flat_params = flatten_nam_params(params, param_dtype)
    n_layers = (len(flat_params) - 1) // 2

    # Batch-on-lanes layout, branches stacked on sublanes (wrapper-side layout plumbing).
    x2 = jnp.concatenate([events.T, non_events.T], axis=0)      # [2F, B]

    in_specs = [pl.BlockSpec((2 * F, tile_b), lambda i: (0, i))]
    # Constant-index weight blocks stay VMEM-resident across grid steps (no re-DMA).
    in_specs += [pl.BlockSpec(p.shape, lambda i: (0, 0)) for p in flat_params]

    out = pl.pallas_call(
        functools.partial(_rem_nam_logit_kernel, n_layers),
        out_shape=jax.ShapeDtypeStruct((1, B), jnp.float32),
        grid=(num_tiles,),
        in_specs=in_specs,
        out_specs=pl.BlockSpec((1, tile_b), lambda i: (0, i)),
        compiler_params=pltpu.CompilerParams(
            dimension_semantics=("parallel",),
            vmem_limit_bytes=48 * 1024 * 1024),  # headroom; within v7x's 64 MiB physical
    )(x2, *flat_params)
    return out.reshape(B)


# ----------------------------------------------------------------------------
# Parameter init + pure-JAX reference (original stacked per-feature layout)
# ----------------------------------------------------------------------------
def init_nam_params(key, num_inputs, num_units, hidden_sizes):
    """Deterministic synthetic NAM parameters (stacked per-feature nets)."""
    F = num_inputs
    U = max(num_units)
    n_keys = 4 + 2 * len(hidden_sizes)
    keys = jax.random.split(key, n_keys)

    w1 = jax.random.normal(keys[0], (F, U), jnp.float32) * 0.5
    b1 = jax.random.normal(keys[1], (F, U), jnp.float32) * 0.1
    # Zero-pad features whose first layer has fewer than U units (padded units give
    # relu(0) = 0 and contribute nothing downstream -> exact equivalence).
    unit_mask = (jnp.arange(U)[None, :] < jnp.asarray(num_units)[:, None]).astype(jnp.float32)
    w1 = w1 * unit_mask
    b1 = b1 * unit_mask

    hidden = []
    prev = U
    ki = 2
    for h in hidden_sizes:
        wk = jax.random.normal(keys[ki], (F, prev, h), jnp.float32) / jnp.sqrt(float(prev))
        bk = jax.random.normal(keys[ki + 1], (F, h), jnp.float32) * 0.1
        hidden.append((wk, bk))
        prev = h
        ki += 2

    wout = jax.random.normal(keys[ki], (F, prev), jnp.float32) / jnp.sqrt(float(prev))
    bout = jax.random.normal(keys[ki + 1], (1, F), jnp.float32) * 0.1
    return w1, b1, hidden, wout, bout


def _nam_apply_ref(x, w1, b1, hidden_params, wout, bout):
    """Per-feature NAM contributions (reference math). x: [B, F] -> [B, F]."""
    h = jnp.maximum(x[:, :, None] * w1[None, :, :] + b1[None, :, :], 0.0)   # [B, F, U]
    for wk, bk in hidden_params:
        h = jnp.einsum("bfu,fuh->bfh", h, wk, preferred_element_type=jnp.float32)
        h = jnp.maximum(h + bk[None, :, :], 0.0)
    return jnp.sum(h * wout[None, :, :], axis=-1) + bout                    # [B, F]


def rem_nam_logit_reference(events, non_events, params):
    """Pure-JAX reference (same math as the PyTorch module, no Pallas)."""
    w1, b1, hidden, wout, bout = params
    c_ev = _nam_apply_ref(events, w1, b1, hidden, wout, bout)
    c_nev = _nam_apply_ref(non_events, w1, b1, hidden, wout, bout)
    return jax.nn.sigmoid(jnp.sum(c_ev - c_nev, axis=-1))


if __name__ == "__main__":
    # Module config (small, consistent with the __init__ signature).
    num_inputs = 4                       # F
    num_units = [16, 12, 16, 8]          # per-feature first-layer sizes
    hidden_sizes = [16]                  # shared hidden sizes
    # dropout / feature_dropout are identity at inference -> no-op here.
    B = 256                              # lane-dense tiles; default picker -> 1 or 2 steps

    key = jax.random.PRNGKey(0)
    k_ev, k_nev, k_params = jax.random.split(key, 3)
    events = jax.random.normal(k_ev, (B, num_inputs), jnp.float32)
    non_events = jax.random.normal(k_nev, (B, num_inputs), jnp.float32)

    params = init_nam_params(k_params, num_inputs, num_units, hidden_sizes)
    ref = jax.block_until_ready(rem_nam_logit_reference(events, non_events, params))

    # 1) Exactness of the structural rewrite (f32 weights, default tiling).
    out_f32 = jax.block_until_ready(
        rem_nam_logit(events, non_events, params, param_dtype=jnp.float32))
    assert out_f32.shape == (B,)
    assert jnp.max(jnp.abs(out_f32 - ref)) < 1e-5, jnp.max(jnp.abs(out_f32 - ref))

    # 2) Default fast path: bf16 weights, f32 MXU accumulation.
    out_bf16 = jax.block_until_ready(rem_nam_logit(events, non_events, params))
    assert jnp.max(jnp.abs(out_bf16 - ref)) < 5e-2, jnp.max(jnp.abs(out_bf16 - ref))

    # 3) Explicit two-step lane-dense tiling (v7x-style balanced split).
    out_tiled = jax.block_until_ready(
        rem_nam_logit(events, non_events, params, tile_b=128, param_dtype=jnp.float32))
    assert jnp.max(jnp.abs(out_tiled - ref)) < 1e-5, jnp.max(jnp.abs(out_tiled - ref))

    print("KERNEL_OK")
</pallas_src>

<mosaic_0001>
module attributes {stable_mosaic.version = 11 : i64} {
  func.func @_rem_nam_logit_kernel(%arg0: i32, %arg1: memref<8x256xf32, #tpu.memory_space<vmem>>, %arg2: memref<128x8xf32, #tpu.memory_space<vmem>>, %arg3: memref<128x1xf32, #tpu.memory_space<vmem>>, %arg4: memref<128x128xf32, #tpu.memory_space<vmem>>, %arg5: memref<128x1xf32, #tpu.memory_space<vmem>>, %arg6: memref<1x128xf32, #tpu.memory_space<vmem>>, %arg7: memref<1x256xf32, #tpu.memory_space<vmem>>) attributes {dimension_semantics = [#tpu.dimension_semantics<parallel>], iteration_bounds = array<i64: 1>, scalar_prefetch = 0 : i64, scratch_operands = 0 : i64, tpu.core_type = #tpu.core_type<tc>, window_params = [{transform_indices = @transform_0, window_bounds = array<i64: 8, 256>}, {pipeline_mode = #tpu.pipeline_mode<synchronous>, transform_indices = @transform_1, window_bounds = array<i64: 128, 8>}, {pipeline_mode = #tpu.pipeline_mode<synchronous>, transform_indices = @transform_2, window_bounds = array<i64: 128, 1>}, {pipeline_mode = #tpu.pipeline_mode<synchronous>, transform_indices = @transform_3, window_bounds = array<i64: 128, 128>}, {pipeline_mode = #tpu.pipeline_mode<synchronous>, transform_indices = @transform_4, window_bounds = array<i64: 128, 1>}, {pipeline_mode = #tpu.pipeline_mode<synchronous>, transform_indices = @transform_5, window_bounds = array<i64: 1, 128>}, {transform_indices = @transform_6, window_bounds = array<i64: 1, 256>}]} {
    %c0 = arith.constant 0 : index
    %c0_0 = arith.constant 0 : index
    %0 = vector.load %arg1[%c0, %c0_0] : memref<8x256xf32, #tpu.memory_space<vmem>>, vector<8x256xf32>
    %c0_1 = arith.constant 0 : index
    %c0_2 = arith.constant 0 : index
    %1 = vector.load %arg2[%c0_1, %c0_2] : memref<128x8xf32, #tpu.memory_space<vmem>>, vector<128x8xf32>
    %c0_3 = arith.constant 0 : index
    %c0_4 = arith.constant 0 : index
    %2 = vector.load %arg3[%c0_3, %c0_4] : memref<128x1xf32, #tpu.memory_space<vmem>>, vector<128x1xf32>
    %cst = arith.constant dense<0.000000e+00> : vector<128x256xf32>
    %3 = tpu.matmul %1, %0, %cst {dimension_numbers = #tpu.dot_dimension_numbers<[1], [0], [0], [1], [0, 0, 1, 1], [], []>} : vector<128x8xf32>, vector<8x256xf32>, vector<128x256xf32> -> vector<128x256xf32>
    %4 = vector.broadcast %2 : vector<128x1xf32> to vector<128x256xf32>
    %5 = arith.addf %3, %4 : vector<128x256xf32>
    %cst_5 = arith.constant 0.000000e+00 : f32
    %6 = vector.broadcast %cst_5 : f32 to vector<128x256xf32>
    %7 = arith.maximumf %5, %6 : vector<128x256xf32>
    %c0_6 = arith.constant 0 : index
    %c0_7 = arith.constant 0 : index
    %8 = vector.load %arg4[%c0_6, %c0_7] : memref<128x128xf32, #tpu.memory_space<vmem>>, vector<128x128xf32>
    %c0_8 = arith.constant 0 : index
    %c0_9 = arith.constant 0 : index
    %9 = vector.load %arg5[%c0_8, %c0_9] : memref<128x1xf32, #tpu.memory_space<vmem>>, vector<128x1xf32>
    %cst_10 = arith.constant dense<0.000000e+00> : vector<128x256xf32>
    %10 = tpu.matmul %8, %7, %cst_10 {dimension_numbers = #tpu.dot_dimension_numbers<[1], [0], [0], [1], [0, 0, 1, 1], [], []>} : vector<128x128xf32>, vector<128x256xf32>, vector<128x256xf32> -> vector<128x256xf32>
    %11 = vector.broadcast %9 : vector<128x1xf32> to vector<128x256xf32>
    %12 = arith.addf %10, %11 : vector<128x256xf32>
    %cst_11 = arith.constant 0.000000e+00 : f32
    %13 = vector.broadcast %cst_11 : f32 to vector<128x256xf32>
    %14 = arith.maximumf %12, %13 : vector<128x256xf32>
    %c0_12 = arith.constant 0 : index
    %c0_13 = arith.constant 0 : index
    %15 = vector.load %arg6[%c0_12, %c0_13] : memref<1x128xf32, #tpu.memory_space<vmem>>, vector<1x128xf32>
    %cst_14 = arith.constant dense<0.000000e+00> : vector<1x256xf32>
    %16 = tpu.matmul %15, %14, %cst_14 {dimension_numbers = #tpu.dot_dimension_numbers<[1], [0], [0], [1], [0, 0, 1, 1], [], []>} : vector<1x128xf32>, vector<128x256xf32>, vector<1x256xf32> -> vector<1x256xf32>
    %17 = arith.negf %16 : vector<1x256xf32>
    %18 = math.exp %17 : vector<1x256xf32>
    %cst_15 = arith.constant 1.000000e+00 : f32
    %19 = vector.broadcast %cst_15 : f32 to vector<1x256xf32>
    %20 = arith.addf %19, %18 : vector<1x256xf32>
    %21 = arith.divf %19, %20 : vector<1x256xf32>
    %c0_16 = arith.constant 0 : index
    %c0_17 = arith.constant 0 : index
    %22 = vector.load %arg7[%c0_16, %c0_17] : memref<1x256xf32, #tpu.memory_space<vmem>>, vector<1x256xf32>
    tpu.vector_store %arg7[%c0_16, %c0_17], %21 {strides = array<i32>} : memref<1x256xf32, #tpu.memory_space<vmem>>, vector<1x256xf32>,
    return
  }
  func.func @transform_0(%arg0: i32) -> (i32, i32) {
    %c0_i32 = arith.constant 0 : i32
    %c0_i32_0 = arith.constant 0 : i32
    return %c0_i32, %arg0 : i32, i32
  }
  func.func @transform_1(%arg0: i32) -> (i32, i32) {
    %c0_i32 = arith.constant 0 : i32
    %c0_i32_0 = arith.constant 0 : i32
    %c0_i32_1 = arith.constant 0 : i32
    return %c0_i32, %c0_i32_0 : i32, i32
  }
  func.func @transform_2(%arg0: i32) -> (i32, i32) {
    %c0_i32 = arith.constant 0 : i32
    %c0_i32_0 = arith.constant 0 : i32
    %c0_i32_1 = arith.constant 0 : i32
    return %c0_i32, %c0_i32_0 : i32, i32
  }
  func.func @transform_3(%arg0: i32) -> (i32, i32) {
    %c0_i32 = arith.constant 0 : i32
    %c0_i32_0 = arith.constant 0 : i32
    %c0_i32_1 = arith.constant 0 : i32
    return %c0_i32, %c0_i32_0 : i32, i32
  }
  func.func @transform_4(%arg0: i32) -> (i32, i32) {
    %c0_i32 = arith.constant 0 : i32
    %c0_i32_0 = arith.constant 0 : i32
    %c0_i32_1 = arith.constant 0 : i32
    return %c0_i32, %c0_i32_0 : i32, i32
  }
  func.func @transform_5(%arg0: i32) -> (i32, i32) {
    %c0_i32 = arith.constant 0 : i32
    %c0_i32_0 = arith.constant 0 : i32
    %c0_i32_1 = arith.constant 0 : i32
    return %c0_i32, %c0_i32_0 : i32, i32
  }
  func.func @transform_6(%arg0: i32) -> (i32, i32) {
    %c0_i32 = arith.constant 0 : i32
    %c0_i32_0 = arith.constant 0 : i32
    return %c0_i32, %arg0 : i32, i32
  }
}

</mosaic_0001>

<llo_original>
// kernel: tpu_custom_call.1
$region0: #{tpu_custom_call.1}
  #allocation0 [shape = 'u32[]', space=smem, size = 0x4, offset = 0x4, fixed_abs, tag = 'smem constant byte address 0x4 - core index']
  #allocation1 [shape = 'u32[144,128]{1,0:T(1,128)}', space=vmem, size = 0x12000, scoped, tag = 'internal scratch']
  %s0 = inlined_call_operand.vmem [shape: f32[8,256], index: 0, kind: input, shape index: {}]
  %s1 = inlined_call_operand.vmem [shape: f32[128,8], index: 1, kind: input, shape index: {}]
  %s2 = inlined_call_operand.vmem [shape: f32[128,1], index: 2, kind: input, shape index: {}]
  %s3 = inlined_call_operand.vmem [shape: f32[128,128], index: 3, kind: input, shape index: {}]
  %s4 = inlined_call_operand.vmem [shape: f32[128,1], index: 4, kind: input, shape index: {}]
  %s5 = inlined_call_operand.vmem [shape: f32[1,128], index: 5, kind: input, shape index: {}]
  %s6 = inlined_call_operand.hbm [shape: f32[1,256], index: 6, kind: output, shape index: {}]
  %s7 = sld [smem:[#allocation0]]
  $region34: #{tpu_custom_call.1} parent=0
    _
  %s9 = ssub.s32 1, %s7
  %s10 = scalar_select 0, %s9, %s7
  $region1: #{tpu_custom_call.1} parent=0
    #allocation2 [shape = 'u8[1024]{0}', space=vmem, size = 0x400, scoped, tag = 'output window, operand 0, single buffered']
    #allocation3 [shape = 's32[1]{0}', space=sflag, size = 0x4, scoped, tag = 'scoped memory for tpu_custom_call.1']
    %11 = vsyncpa [#allocation3], 0
    // Predicated region
    $region2: #{tpu_custom_call.1} parent=1 // pred_check
      _
    $region3: #{tpu_custom_call.1} parent=1 // pred_check_branch
      %13 = sbr.rel (0) target = $region5
    $region4: #{tpu_custom_call.1} parent=1 // pred_region
      _
    $region5: #{tpu_custom_call.1} parent=1 // pred_fallthru
      _
    // Predicated region
    $region6: #{tpu_custom_call.1} parent=1 // pred_check
      _
    $region7: #{tpu_custom_call.1} parent=1 // pred_check_branch
      %15 = sbr.rel (0) target = $region9
    $region8: #{tpu_custom_call.1} parent=1 // pred_region
      _
    $region9: #{tpu_custom_call.1} parent=1 // pred_fallthru
      _
    // Predicated region
    $region10: #{tpu_custom_call.1} parent=1 // pred_check
      _
    $region11: #{tpu_custom_call.1} parent=1 // pred_check_branch
      %17 = sbr.rel (0) target = $region13
    $region12: #{tpu_custom_call.1} parent=1 // pred_region
      _
    $region13: #{tpu_custom_call.1} parent=1 // pred_fallthru
      _
    // Predicated region
    $region14: #{tpu_custom_call.1} parent=1 // pred_check
      _
    $region15: #{tpu_custom_call.1} parent=1 // pred_check_branch
      %19 = sbr.rel (0) target = $region17
    $region16: #{tpu_custom_call.1} parent=1 // pred_region
      _
    $region17: #{tpu_custom_call.1} parent=1 // pred_fallthru
      _
    // Predicated region
    $region18: #{tpu_custom_call.1} parent=1 // pred_check
      _
    $region19: #{tpu_custom_call.1} parent=1 // pred_check_branch
      %21 = sbr.rel (0) target = $region21
    $region20: #{tpu_custom_call.1} parent=1 // pred_region
      _
    $region21: #{tpu_custom_call.1} parent=1 // pred_fallthru
      _
    // Predicated region
    $region22: #{tpu_custom_call.1} parent=1 // pred_check
      _
    $region23: #{tpu_custom_call.1} parent=1 // pred_check_branch
      %23 = sbr.rel (0) target = $region25
    $region24: #{tpu_custom_call.1} parent=1 // pred_region
      _
    $region25: #{tpu_custom_call.1} parent=1 // pred_fallthru
      _
    %v24 = vld [vmem:[%s0] sm:$0xff]
    %v25 = vld [vmem:[%s0 + $0x8] sm:$0xff]
    %v26 = vld [vmem:[%s1] sm:$0xff]
    %v27 = vld [vmem:[%s1 + $0x8] sm:$0xff]
    %v28 = vld [vmem:[%s1 + $0x10] sm:$0xff]
    %v29 = vld [vmem:[%s1 + $0x18] sm:$0xff]
    %v30 = vld [vmem:[%s1 + $0x20] sm:$0xff]
    %v31 = vld [vmem:[%s1 + $0x28] sm:$0xff]
    %v32 = vld [vmem:[%s1 + $0x30] sm:$0xff]
    %v33 = vld [vmem:[%s1 + $0x38] sm:$0xff]
    %v34 = vld [vmem:[%s1 + $0x40] sm:$0xff]
    %v35 = vld [vmem:[%s1 + $0x48] sm:$0xff]
    %v36 = vld [vmem:[%s1 + $0x50] sm:$0xff]
    %v37 = vld [vmem:[%s1 + $0x58] sm:$0xff]
    %v38 = vld [vmem:[%s1 + $0x60] sm:$0xff]
    %v39 = vld [vmem:[%s1 + $0x68] sm:$0xff]
    %v40 = vld [vmem:[%s1 + $0x70] sm:$0xff]
    %v41 = vld [vmem:[%s1 + $0x78] sm:$0xff]
    %v42 = vld [vmem:[%s2] sm:$0xff]
    %v43 = vld [vmem:[%s2 + $0x8] sm:$0xff]
    %v44 = vld [vmem:[%s2 + $0x10] sm:$0xff]
    %v45 = vld [vmem:[%s2 + $0x18] sm:$0xff]
    %v46 = vld [vmem:[%s2 + $0x20] sm:$0xff]
    %v47 = vld [vmem:[%s2 + $0x28] sm:$0xff]
    %v48 = vld [vmem:[%s2 + $0x30] sm:$0xff]
    %v49 = vld [vmem:[%s2 + $0x38] sm:$0xff]
    %v50 = vld [vmem:[%s2 + $0x40] sm:$0xff]
    %v51 = vld [vmem:[%s2 + $0x48] sm:$0xff]
    %v52 = vld [vmem:[%s2 + $0x50] sm:$0xff]
    %v53 = vld [vmem:[%s2 + $0x58] sm:$0xff]
    %v54 = vld [vmem:[%s2 + $0x60] sm:$0xff]
    %v55 = vld [vmem:[%s2 + $0x68] sm:$0xff]
    %v56 = vld [vmem:[%s2 + $0x70] sm:$0xff]
    %v57 = vld [vmem:[%s2 + $0x78] sm:$0xff]
    %59 = vset.pattern.permute.xlu0 0
    %60 = vperm.xlu0 %59, %v42
    %v61 = vpop.permute.xlu0 %60
    %64 = vset.pattern.permute.xlu0 0
    %65 = vperm.xlu0 %64, %v43
    %v66 = vpop.permute.xlu0 %65
    %69 = vset.pattern.permute.xlu0 0
    %70 = vperm.xlu0 %69, %v44
    %v71 = vpop.permute.xlu0 %70
    %74 = vset.pattern.permute.xlu0 0
    %75 = vperm.xlu0 %74, %v45
    %v76 = vpop.permute.xlu0 %75
    %79 = vset.pattern.permute.xlu0 0
    %80 = vperm.xlu0 %79, %v46
    %v81 = vpop.permute.xlu0 %80
    %84 = vset.pattern.permute.xlu0 0
    %85 = vperm.xlu0 %84, %v47
    %v86 = vpop.permute.xlu0 %85
    %89 = vset.pattern.permute.xlu0 0
    %90 = vperm.xlu0 %89, %v48
    %v91 = vpop.permute.xlu0 %90
    %94 = vset.pattern.permute.xlu0 0
    %95 = vperm.xlu0 %94, %v49
    %v96 = vpop.permute.xlu0 %95
    %99 = vset.pattern.permute.xlu0 0
    %100 = vperm.xlu0 %99, %v50
    %v101 = vpop.permute.xlu0 %100
    %104 = vset.pattern.permute.xlu0 0
    %105 = vperm.xlu0 %104, %v51
    %v106 = vpop.permute.xlu0 %105
    %109 = vset.pattern.permute.xlu0 0
    %110 = vperm.xlu0 %109, %v52
    %v111 = vpop.permute.xlu0 %110
    %114 = vset.pattern.permute.xlu0 0
    %115 = vperm.xlu0 %114, %v53
    %v116 = vpop.permute.xlu0 %115
    %119 = vset.pattern.permute.xlu0 0
    %120 = vperm.xlu0 %119, %v54
    %v121 = vpop.permute.xlu0 %120
    %124 = vset.pattern.permute.xlu0 0
    %125 = vperm.xlu0 %124, %v55
    %v126 = vpop.permute.xlu0 %125
    %129 = vset.pattern.permute.xlu0 0
    %130 = vperm.xlu0 %129, %v56
    %v131 = vpop.permute.xlu0 %130
    %134 = vset.pattern.permute.xlu0 0
    %135 = vperm.xlu0 %134, %v57
    %v136 = vpop.permute.xlu0 %135
    %vm138 = vcmask 64512
    %v140 = vsel %vm138, %v26, 0
    %v143 = vsel %vm138, %v27, 0
    %v146 = vsel %vm138, %v28, 0
    %v149 = vsel %vm138, %v29, 0
    %v152 = vsel %vm138, %v30, 0
    %v155 = vsel %vm138, %v31, 0
    %v158 = vsel %vm138, %v32, 0
    %v161 = vsel %vm138, %v33, 0
    %v164 = vsel %vm138, %v34, 0
    %v167 = vsel %vm138, %v35, 0
    %v170 = vsel %vm138, %v36, 0
    %v173 = vsel %vm138, %v37, 0
    %v176 = vsel %vm138, %v38, 0
    %v179 = vsel %vm138, %v39, 0
    %v182 = vsel %vm138, %v40, 0
    %v185 = vsel %vm138, %v41, 0
    %187 = vmatprep.subr.mxu0 %v25
    %188 = vmatpush1.msra.mxu0 %v24
    %189 = vmatprep.subr.mxu0 0.0
    %190 = vmatpush1.msra.mxu0 0.0
    %191 = vmatprep.subr.mxu0 0.0
    %192 = vmatpush1.msra.mxu0 0.0
    %193 = vmatprep.subr.mxu0 0.0
    %194 = vmatpush1.msra.mxu0 0.0
    %195 = vmatprep.subr.mxu0 0.0
    %196 = vmatpush1.msra.mxu0 0.0
    %197 = vmatprep.subr.mxu0 0.0
    %198 = vmatpush1.msra.mxu0 0.0
    %199 = vmatprep.subr.mxu0 0.0
    %200 = vmatpush1.msra.mxu0 0.0
    %201 = vmatprep.subr.mxu0 0.0
    %202 = vmatpush1.msra.mxu0 0.0
    %203 = vmatprep.subr.mxu0 0.0
    %204 = vmatpush1.msra.mxu0 0.0
    %205 = vmatprep.subr.mxu0 0.0
    %206 = vmatpush1.msra.mxu0 0.0
    %207 = vmatprep.subr.mxu0 0.0
    %208 = vmatpush1.msra.mxu0 0.0
    %209 = vmatprep.subr.mxu0 0.0
    %210 = vmatpush1.msra.mxu0 0.0
    %211 = vmatprep.subr.mxu0 0.0
    %212 = vmatpush1.msra.mxu0 0.0
    %213 = vmatprep.subr.mxu0 0.0
    %214 = vmatpush1.msra.mxu0 0.0
    %215 = vmatprep.subr.mxu0 0.0
    %216 = vmatpush1.msra.mxu0 0.0
    %217 = vmatprep.subr.mxu0 0.0
    %218 = vmatpush1.msra.mxu0 0.0
    %219 = vmatprep.subr.mxu0 0.0
    %220 = vmatpush1.msra.mxu0 0.0
    %221 = vmatprep.subr.mxu0 0.0
    %222 = vmatpush1.msra.mxu0 0.0
    %223 = vmatprep.subr.mxu0 0.0
    %224 = vmatpush1.msra.mxu0 0.0
    %225 = vmatprep.subr.mxu0 0.0
    %226 = vmatpush1.msra.mxu0 0.0
    %227 = vmatprep.subr.mxu0 0.0
    %228 = vmatpush1.msra.mxu0 0.0
    %229 = vmatprep.subr.mxu0 0.0
    %230 = vmatpush1.msra.mxu0 0.0
    %231 = vmatprep.subr.mxu0 0.0
    %232 = vmatpush1.msra.mxu0 0.0
    %233 = vmatprep.subr.mxu0 0.0
    %234 = vmatpush1.msra.mxu0 0.0
    %235 = vmatprep.subr.mxu0 0.0
    %236 = vmatpush1.msra.mxu0 0.0
    %237 = vmatprep.subr.mxu0 0.0
    %238 = vmatpush1.msra.mxu0 0.0
    %239 = vmatprep.subr.mxu0 0.0
    %240 = vmatpush1.msra.mxu0 0.0
    %241 = vmatprep.subr.mxu0 0.0
    %242 = vmatpush1.msra.mxu0 0.0
    %243 = vmatprep.subr.mxu0 0.0
    %244 = vmatpush1.msra.mxu0 0.0
    %245 = vmatprep.subr.mxu0 0.0
    %246 = vmatpush1.msra.mxu0 0.0
    %247 = vmatprep.subr.mxu0 0.0
    %248 = vmatpush1.msra.mxu0 0.0
    %249 = vmatprep.subr.mxu0 0.0
    %250 = vmatpush1.msra.mxu0 0.0
    %251 = vmatprep.mubr.f32.mxu0 0.0
    %252 = vmatmul.mubr.f32.gmra.mrb[0].mxu0 %v140
    %v253 = vpop.f32.mrb[0].mxu0
    %v254 = vadd.f32 %v61, %v253
    %v255 = vpop.f32.mrb[0].mxu0
    %v256 = vadd.f32 %v61, %v255
    %257 = vmatprep.mubr.f32.mxu0 0.0
    %258 = vmatmul.mubr.f32.gmra.mrb[0].mxu0 %v143
    %v259 = vpop.f32.mrb[0].mxu0
    %v260 = vadd.f32 %v66, %v259
    %v261 = vpop.f32.mrb[0].mxu0
    %v262 = vadd.f32 %v66, %v261
    %263 = vmatprep.mubr.f32.mxu0 0.0
    %264 = vmatmul.mubr.f32.gmra.mrb[0].mxu0 %v146
    %v265 = vpop.f32.mrb[0].mxu0
    %v266 = vadd.f32 %v71, %v265
    %v267 = vpop.f32.mrb[0].mxu0
    %v268 = vadd.f32 %v71, %v267
    %269 = vmatprep.mubr.f32.mxu0 0.0
    %270 = vmatmul.mubr.f32.gmra.mrb[0].mxu0 %v149
    %v271 = vpop.f32.mrb[0].mxu0
    %v272 = vadd.f32 %v76, %v271
    %v273 = vpop.f32.mrb[0].mxu0
    %v274 = vadd.f32 %v76, %v273
    %275 = vmatprep.mubr.f32.mxu0 0.0
    %276 = vmatmul.mubr.f32.gmra.mrb[0].mxu0 %v152
    %v277 = vpop.f32.mrb[0].mxu0
    %v278 = vadd.f32 %v81, %v277
    %v279 = vpop.f32.mrb[0].mxu0
    %v280 = vadd.f32 %v81, %v279
    %281 = vmatprep.mubr.f32.mxu0 0.0
    %282 = vmatmul.mubr.f32.gmra.mrb[0].mxu0 %v155
    %v283 = vpop.f32.mrb[0].mxu0
    %v284 = vadd.f32 %v86, %v283
    %v285 = vpop.f32.mrb[0].mxu0
    %v286 = vadd.f32 %v86, %v285
    %287 = vmatprep.mubr.f32.mxu0 0.0
    %288 = vmatmul.mubr.f32.gmra.mrb[0].mxu0 %v158
    %v289 = vpop.f32.mrb[0].mxu0
    %v290 = vadd.f32 %v91, %v289
    %v291 = vpop.f32.mrb[0].mxu0
    %v292 = vadd.f32 %v91, %v291
    %293 = vmatprep.mubr.f32.mxu0 0.0
    %294 = vmatmul.mubr.f32.gmra.mrb[0].mxu0 %v161
    %v295 = vpop.f32.mrb[0].mxu0
    %v296 = vadd.f32 %v96, %v295
    %v297 = vpop.f32.mrb[0].mxu0
    %v298 = vadd.f32 %v96, %v297
    %299 = vmatprep.mubr.f32.mxu0 0.0
    %300 = vmatmul.mubr.f32.gmra.mrb[0].mxu0 %v164
    %v301 = vpop.f32.mrb[0].mxu0
    %v302 = vadd.f32 %v101, %v301
    %v303 = vpop.f32.mrb[0].mxu0
    %v304 = vadd.f32 %v101, %v303
    %305 = vmatprep.mubr.f32.mxu0 0.0
    %306 = vmatmul.mubr.f32.gmra.mrb[0].mxu0 %v167
    %v307 = vpop.f32.mrb[0].mxu0
    %v308 = vadd.f32 %v106, %v307
    %v309 = vpop.f32.mrb[0].mxu0
    %v310 = vadd.f32 %v106, %v309
    %311 = vmatprep.mubr.f32.mxu0 0.0
    %312 = vmatmul.mubr.f32.gmra.mrb[0].mxu0 %v170
    %v313 = vpop.f32.mrb[0].mxu0
    %v314 = vadd.f32 %v111, %v313
    %v315 = vpop.f32.mrb[0].mxu0
    %v316 = vadd.f32 %v111, %v315
    %317 = vmatprep.mubr.f32.mxu0 0.0
    %318 = vmatmul.mubr.f32.gmra.mrb[0].mxu0 %v173
    %v319 = vpop.f32.mrb[0].mxu0
    %v320 = vadd.f32 %v116, %v319
    %v321 = vpop.f32.mrb[0].mxu0
    %v322 = vadd.f32 %v116, %v321
    %323 = vmatprep.mubr.f32.mxu0 0.0
    %324 = vmatmul.mubr.f32.gmra.mrb[0].mxu0 %v176
    %v325 = vpop.f32.mrb[0].mxu0
    %v326 = vadd.f32 %v121, %v325
    %v327 = vpop.f32.mrb[0].mxu0
    %v328 = vadd.f32 %v121, %v327
    %329 = vmatprep.mubr.f32.mxu0 0.0
    %330 = vmatmul.mubr.f32.gmra.mrb[0].mxu0 %v179
    %v331 = vpop.f32.mrb[0].mxu0
    %v332 = vadd.f32 %v126, %v331
    %v333 = vpop.f32.mrb[0].mxu0
    %v334 = vadd.f32 %v126, %v333
    %335 = vmatprep.mubr.f32.mxu0 0.0
    %336 = vmatmul.mubr.f32.gmra.mrb[0].mxu0 %v182
    %v337 = vpop.f32.mrb[0].mxu0
    %v338 = vadd.f32 %v131, %v337
    %v339 = vpop.f32.mrb[0].mxu0
    %v340 = vadd.f32 %v131, %v339
    %341 = vmatprep.mubr.f32.mxu0 0.0
    %342 = vmatmul.mubr.f32.gmra.mrb[0].mxu0 %v185
    %v343 = vpop.f32.mrb[0].mxu0
    %v344 = vadd.f32 %v136, %v343
    %v345 = vpop.f32.mrb[0].mxu0
    %v346 = vadd.f32 %v136, %v345
    %347 = vdwg.mxu0
    %v348 = vmax.f32 %v254, 0.0
    %v349 = vmax.f32 %v256, 0.0
    %v350 = vmax.f32 %v260, 0.0
    %v351 = vmax.f32 %v262, 0.0
    %v352 = vmax.f32 %v266, 0.0
    %v353 = vmax.f32 %v268, 0.0
    %v354 = vmax.f32 %v272, 0.0
    %v355 = vmax.f32 %v274, 0.0
    %v356 = vmax.f32 %v278, 0.0
    %v357 = vmax.f32 %v280, 0.0
    %v358 = vmax.f32 %v284, 0.0
    %v359 = vmax.f32 %v286, 0.0
    %v360 = vmax.f32 %v290, 0.0
    %v361 = vmax.f32 %v292, 0.0
    %v362 = vmax.f32 %v296, 0.0
    %v363 = vmax.f32 %v298, 0.0
    %v364 = vmax.f32 %v302, 0.0
    %v365 = vmax.f32 %v304, 0.0
    %v366 = vmax.f32 %v308, 0.0
    %v367 = vmax.f32 %v310, 0.0
    %v368 = vmax.f32 %v314, 0.0
    %v369 = vmax.f32 %v316, 0.0
    %v370 = vmax.f32 %v320, 0.0
    %v371 = vmax.f32 %v322, 0.0
    %v372 = vmax.f32 %v326, 0.0
    %v373 = vmax.f32 %v328, 0.0
    %v374 = vmax.f32 %v332, 0.0
    %v375 = vmax.f32 %v334, 0.0
    %v376 = vmax.f32 %v338, 0.0
    %v377 = vmax.f32 %v340, 0.0
    %v378 = vmax.f32 %v344, 0.0
    %v379 = vmax.f32 %v346, 0.0
    %v380 = vld [vmem:[%s3] sm:$0xff]
    %v381 = vld [vmem:[%s3 + $0x8] sm:$0xff]
    %v382 = vld [vmem:[%s3 + $0x10] sm:$0xff]
    %v383 = vld [vmem:[%s3 + $0x18] sm:$0xff]
    %v384 = vld [vmem:[%s3 + $0x20] sm:$0xff]
    %v385 = vld [vmem:[%s3 + $0x28] sm:$0xff]
    %v386 = vld [vmem:[%s3 + $0x30] sm:$0xff]
    %v387 = vld [vmem:[%s3 + $0x38] sm:$0xff]
    %v388 = vld [vmem:[%s3 + $0x40] sm:$0xff]
    %v389 = vld [vmem:[%s3 + $0x48] sm:$0xff]
    %v390 = vld [vmem:[%s3 + $0x50] sm:$0xff]
    %v391 = vld [vmem:[%s3 + $0x58] sm:$0xff]
    %v392 = vld [vmem:[%s3 + $0x60] sm:$0xff]
    %v393 = vld [vmem:[%s3 + $0x68] sm:$0xff]
    %v394 = vld [vmem:[%s3 + $0x70] sm:$0xff]
    %v395 = vld [vmem:[%s3 + $0x78] sm:$0xff]
    %v396 = vld [vmem:[%s4] sm:$0xff]
    %v397 = vld [vmem:[%s4 + $0x8] sm:$0xff]
    %v398 = vld [vmem:[%s4 + $0x10] sm:$0xff]
    %v399 = vld [vmem:[%s4 + $0x18] sm:$0xff]
    %v400 = vld [vmem:[%s4 + $0x20] sm:$0xff]
    %v401 = vld [vmem:[%s4 + $0x28] sm:$0xff]
    %v402 = vld [vmem:[%s4 + $0x30] sm:$0xff]
    %v403 = vld [vmem:[%s4 + $0x38] sm:$0xff]
    %v404 = vld [vmem:[%s4 + $0x40] sm:$0xff]
    %v405 = vld [vmem:[%s4 + $0x48] sm:$0xff]
    %v406 = vld [vmem:[%s4 + $0x50] sm:$0xff]
    %v407 = vld [vmem:[%s4 + $0x58] sm:$0xff]
    %v408 = vld [vmem:[%s4 + $0x60] sm:$0xff]
    %v409 = vld [vmem:[%s4 + $0x68] sm:$0xff]
    %v410 = vld [vmem:[%s4 + $0x70] sm:$0xff]
    %v411 = vld [vmem:[%s4 + $0x78] sm:$0xff]
    %413 = vset.pattern.permute.xlu0 0
    %414 = vperm.xlu0 %413, %v396
    %v415 = vpop.permute.xlu0 %414
    %418 = vset.pattern.permute.xlu0 0
    %419 = vperm.xlu0 %418, %v397
    %v420 = vpop.permute.xlu0 %419
    %423 = vset.pattern.permute.xlu0 0
    %424 = vperm.xlu0 %423, %v398
    %v425 = vpop.permute.xlu0 %424
    %428 = vset.pattern.permute.xlu0 0
    %429 = vperm.xlu0 %428, %v399
    %v430 = vpop.permute.xlu0 %429
    %433 = vset.pattern.permute.xlu0 0
    %434 = vperm.xlu0 %433, %v400
    %v435 = vpop.permute.xlu0 %434
    %438 = vset.pattern.permute.xlu0 0
    %439 = vperm.xlu0 %438, %v401
    %v440 = vpop.permute.xlu0 %439
    %443 = vset.pattern.permute.xlu0 0
    %444 = vperm.xlu0 %443, %v402
    %v445 = vpop.permute.xlu0 %444
    %448 = vset.pattern.permute.xlu0 0
    %449 = vperm.xlu0 %448, %v403
    %v450 = vpop.permute.xlu0 %449
    %453 = vset.pattern.permute.xlu0 0
    %454 = vperm.xlu0 %453, %v404
    %v455 = vpop.permute.xlu0 %454
    %458 = vset.pattern.permute.xlu0 0
    %459 = vperm.xlu0 %458, %v405
    %v460 = vpop.permute.xlu0 %459
    %463 = vset.pattern.permute.xlu0 0
    %464 = vperm.xlu0 %463, %v406
    %v465 = vpop.permute.xlu0 %464
    %468 = vset.pattern.permute.xlu0 0
    %469 = vperm.xlu0 %468, %v407
    %v470 = vpop.permute.xlu0 %469
    %473 = vset.pattern.permute.xlu0 0
    %474 = vperm.xlu0 %473, %v408
    %v475 = vpop.permute.xlu0 %474
    %478 = vset.pattern.permute.xlu0 0
    %479 = vperm.xlu0 %478, %v409
    %v480 = vpop.permute.xlu0 %479
    %483 = vset.pattern.permute.xlu0 0
    %484 = vperm.xlu0 %483, %v410
    %v485 = vpop.permute.xlu0 %484
    %488 = vset.pattern.permute.xlu0 0
    %489 = vperm.xlu0 %488, %v411
    %v490 = vpop.permute.xlu0 %489
    %492 = vmatprep.subr.mxu0 %v349
    %493 = vmatpush1.msra.mxu0 %v348
    %494 = vmatprep.subr.mxu0 %v351
    %495 = vmatpush1.msra.mxu0 %v350
    %496 = vmatprep.subr.mxu0 %v353
    %497 = vmatpush1.msra.mxu0 %v352
    %498 = vmatprep.subr.mxu0 %v355
    %499 = vmatpush1.msra.mxu0 %v354
    %500 = vmatprep.subr.mxu0 %v357
    %501 = vmatpush1.msra.mxu0 %v356
    %502 = vmatprep.subr.mxu0 %v359
    %503 = vmatpush1.msra.mxu0 %v358
    %504 = vmatprep.subr.mxu0 %v361
    %505 = vmatpush1.msra.mxu0 %v360
    %506 = vmatprep.subr.mxu0 %v363
    %507 = vmatpush1.msra.mxu0 %v362
    %508 = vmatprep.subr.mxu0 %v365
    %509 = vmatpush1.msra.mxu0 %v364
    %510 = vmatprep.subr.mxu0 %v367
    %511 = vmatpush1.msra.mxu0 %v366
    %512 = vmatprep.subr.mxu0 %v369
    %513 = vmatpush1.msra.mxu0 %v368
    %514 = vmatprep.subr.mxu0 %v371
    %515 = vmatpush1.msra.mxu0 %v370
    %516 = vmatprep.subr.mxu0 %v373
    %517 = vmatpush1.msra.mxu0 %v372
    %518 = vmatprep.subr.mxu0 %v375
    %519 = vmatpush1.msra.mxu0 %v374
    %520 = vmatprep.subr.mxu0 %v377
    %521 = vmatpush1.msra.mxu0 %v376
    %522 = vmatprep.subr.mxu0 %v379
    %523 = vmatpush1.msra.mxu0 %v378
    %524 = vmatprep.subr.mxu0 0.0
    %525 = vmatpush1.msra.mxu0 0.0
    %526 = vmatprep.subr.mxu0 0.0
    %527 = vmatpush1.msra.mxu0 0.0
    %528 = vmatprep.subr.mxu0 0.0
    %529 = vmatpush1.msra.mxu0 0.0
    %530 = vmatprep.subr.mxu0 0.0
    %531 = vmatpush1.msra.mxu0 0.0
    %532 = vmatprep.subr.mxu0 0.0
    %533 = vmatpush1.msra.mxu0 0.0
    %534 = vmatprep.subr.mxu0 0.0
    %535 = vmatpush1.msra.mxu0 0.0
    %536 = vmatprep.subr.mxu0 0.0
    %537 = vmatpush1.msra.mxu0 0.0
    %538 = vmatprep.subr.mxu0 0.0
    %539 = vmatpush1.msra.mxu0 0.0
    %540 = vmatprep.subr.mxu0 0.0
    %541 = vmatpush1.msra.mxu0 0.0
    %542 = vmatprep.subr.mxu0 0.0
    %543 = vmatpush1.msra.mxu0 0.0
    %544 = vmatprep.subr.mxu0 0.0
    %545 = vmatpush1.msra.mxu0 0.0
    %546 = vmatprep.subr.mxu0 0.0
    %547 = vmatpush1.msra.mxu0 0.0
    %548 = vmatprep.subr.mxu0 0.0
    %549 = vmatpush1.msra.mxu0 0.0
    %550 = vmatprep.subr.mxu0 0.0
    %551 = vmatpush1.msra.mxu0 0.0
    %552 = vmatprep.subr.mxu0 0.0
    %553 = vmatpush1.msra.mxu0 0.0
    %554 = vmatprep.subr.mxu0 0.0
    %555 = vmatpush1.msra.mxu0 0.0
    %556 = vmatprep.mubr.f32.mxu0 0.0
    %557 = vmatmul.mubr.f32.gmra.mrb[0].mxu0 %v380
    %v558 = vpop.f32.mrb[0].mxu0
    %v559 = vadd.f32 %v415, %v558
    %v560 = vpop.f32.mrb[0].mxu0
    %v561 = vadd.f32 %v415, %v560
    %562 = vmatprep.mubr.f32.mxu0 0.0
    %563 = vmatmul.mubr.f32.gmra.mrb[0].mxu0 %v381
    %v564 = vpop.f32.mrb[0].mxu0
    %v565 = vadd.f32 %v420, %v564
    %v566 = vpop.f32.mrb[0].mxu0
    %v567 = vadd.f32 %v420, %v566
    %568 = vmatprep.mubr.f32.mxu0 0.0
    %569 = vmatmul.mubr.f32.gmra.mrb[0].mxu0 %v382
    %v570 = vpop.f32.mrb[0].mxu0
    %v571 = vadd.f32 %v425, %v570
    %v572 = vpop.f32.mrb[0].mxu0
    %v573 = vadd.f32 %v425, %v572
    %574 = vmatprep.mubr.f32.mxu0 0.0
    %575 = vmatmul.mubr.f32.gmra.mrb[0].mxu0 %v383
    %v576 = vpop.f32.mrb[0].mxu0
    %v577 = vadd.f32 %v430, %v576
    %v578 = vpop.f32.mrb[0].mxu0
    %v579 = vadd.f32 %v430, %v578
    %580 = vmatprep.mubr.f32.mxu0 0.0
    %581 = vmatmul.mubr.f32.gmra.mrb[0].mxu0 %v384
    %v582 = vpop.f32.mrb[0].mxu0
    %v583 = vadd.f32 %v435, %v582
    %v584 = vpop.f32.mrb[0].mxu0
    %v585 = vadd.f32 %v435, %v584
    %586 = vmatprep.mubr.f32.mxu0 0.0
    %587 = vmatmul.mubr.f32.gmra.mrb[0].mxu0 %v385
    %v588 = vpop.f32.mrb[0].mxu0
    %v589 = vadd.f32 %v440, %v588
    %v590 = vpop.f32.mrb[0].mxu0
    %v591 = vadd.f32 %v440, %v590
    %592 = vmatprep.mubr.f32.mxu0 0.0
    %593 = vmatmul.mubr.f32.gmra.mrb[0].mxu0 %v386
    %v594 = vpop.f32.mrb[0].mxu0
    %v595 = vadd.f32 %v445, %v594
    %v596 = vpop.f32.mrb[0].mxu0
    %v597 = vadd.f32 %v445, %v596
    %598 = vmatprep.mubr.f32.mxu0 0.0
    %599 = vmatmul.mubr.f32.gmra.mrb[0].mxu0 %v387
    %v600 = vpop.f32.mrb[0].mxu0
    %v601 = vadd.f32 %v450, %v600
    %v602 = vpop.f32.mrb[0].mxu0
    %v603 = vadd.f32 %v450, %v602
    %604 = vmatprep.mubr.f32.mxu0 0.0
    %605 = vmatmul.mubr.f32.gmra.mrb[0].mxu0 %v388
    %v606 = vpop.f32.mrb[0].mxu0
    %v607 = vadd.f32 %v455, %v606
    %v608 = vpop.f32.mrb[0].mxu0
    %v609 = vadd.f32 %v455, %v608
    %610 = vmatprep.mubr.f32.mxu0 0.0
    %611 = vmatmul.mubr.f32.gmra.mrb[0].mxu0 %v389
    %v612 = vpop.f32.mrb[0].mxu0
    %v613 = vadd.f32 %v460, %v612
    %v614 = vpop.f32.mrb[0].mxu0
    %v615 = vadd.f32 %v460, %v614
    %616 = vmatprep.mubr.f32.mxu0 0.0
    %617 = vmatmul.mubr.f32.gmra.mrb[0].mxu0 %v390
    %v618 = vpop.f32.mrb[0].mxu0
    %v619 = vadd.f32 %v465, %v618
    %v620 = vpop.f32.mrb[0].mxu0
    %v621 = vadd.f32 %v465, %v620
    %622 = vmatprep.mubr.f32.mxu0 0.0
    %623 = vmatmul.mubr.f32.gmra.mrb[0].mxu0 %v391
    %v624 = vpop.f32.mrb[0].mxu0
    %v625 = vadd.f32 %v470, %v624
    %v626 = vpop.f32.mrb[0].mxu0
    %v627 = vadd.f32 %v470, %v626
    %628 = vmatprep.mubr.f32.mxu0 0.0
    %629 = vmatmul.mubr.f32.gmra.mrb[0].mxu0 %v392
    %v630 = vpop.f32.mrb[0].mxu0
    %v631 = vadd.f32 %v475, %v630
    %v632 = vpop.f32.mrb[0].mxu0
    %v633 = vadd.f32 %v475, %v632
    %634 = vmatprep.mubr.f32.mxu0 0.0
    %635 = vmatmul.mubr.f32.gmra.mrb[0].mxu0 %v393
    %v636 = vpop.f32.mrb[0].mxu0
    %v637 = vadd.f32 %v480, %v636
    %v638 = vpop.f32.mrb[0].mxu0
    %v639 = vadd.f32 %v480, %v638
    %640 = vmatprep.mubr.f32.mxu0 0.0
    %641 = vmatmul.mubr.f32.gmra.mrb[0].mxu0 %v394
    %v642 = vpop.f32.mrb[0].mxu0
    %v643 = vadd.f32 %v485, %v642
    %v644 = vpop.f32.mrb[0].mxu0
    %v645 = vadd.f32 %v485, %v644
    %646 = vmatprep.mubr.f32.mxu0 0.0
    %647 = vmatmul.mubr.f32.gmra.mrb[0].mxu0 %v395
    %v648 = vpop.f32.mrb[0].mxu0
    %v649 = vadd.f32 %v490, %v648
    %v650 = vpop.f32.mrb[0].mxu0
    %v651 = vadd.f32 %v490, %v650
    %652 = vdwg.mxu0
    %v653 = vmax.f32 %v559, 0.0
    %v654 = vmax.f32 %v561, 0.0
    %v655 = vmax.f32 %v565, 0.0
    %v656 = vmax.f32 %v567, 0.0
    %v657 = vmax.f32 %v571, 0.0
    %v658 = vmax.f32 %v573, 0.0
    %v659 = vmax.f32 %v577, 0.0
    %v660 = vmax.f32 %v579, 0.0
    %v661 = vmax.f32 %v583, 0.0
    %v662 = vmax.f32 %v585, 0.0
    %v663 = vmax.f32 %v589, 0.0
    %v664 = vmax.f32 %v591, 0.0
    %v665 = vmax.f32 %v595, 0.0
    %v666 = vmax.f32 %v597, 0.0
    %v667 = vmax.f32 %v601, 0.0
    %v668 = vmax.f32 %v603, 0.0
    %v669 = vmax.f32 %v607, 0.0
    %v670 = vmax.f32 %v609, 0.0
    %v671 = vmax.f32 %v613, 0.0
    %v672 = vmax.f32 %v615, 0.0
    %v673 = vmax.f32 %v619, 0.0
    %v674 = vmax.f32 %v621, 0.0
    %v675 = vmax.f32 %v625, 0.0
    %v676 = vmax.f32 %v627, 0.0
    %v677 = vmax.f32 %v631, 0.0
    %v678 = vmax.f32 %v633, 0.0
    %v679 = vmax.f32 %v637, 0.0
    %v680 = vmax.f32 %v639, 0.0
    %v681 = vmax.f32 %v643, 0.0
    %v682 = vmax.f32 %v645, 0.0
    %v683 = vmax.f32 %v649, 0.0
    %v684 = vmax.f32 %v651, 0.0
    %v685 = vld [vmem:[%s5] sm:$0x1]
    %686 = vmatprep.subr.mxu0 %v654
    %687 = vmatpush1.msra.mxu0 %v653
    %688 = vmatprep.subr.mxu0 %v656
    %689 = vmatpush1.msra.mxu0 %v655
    %690 = vmatprep.subr.mxu0 %v658
    %691 = vmatpush1.msra.mxu0 %v657
    %692 = vmatprep.subr.mxu0 %v660
    %693 = vmatpush1.msra.mxu0 %v659
    %694 = vmatprep.subr.mxu0 %v662
    %695 = vmatpush1.msra.mxu0 %v661
    %696 = vmatprep.subr.mxu0 %v664
    %697 = vmatpush1.msra.mxu0 %v663
    %698 = vmatprep.subr.mxu0 %v666
    %699 = vmatpush1.msra.mxu0 %v665
    %700 = vmatprep.subr.mxu0 %v668
    %701 = vmatpush1.msra.mxu0 %v667
    %702 = vmatprep.subr.mxu0 %v670
    %703 = vmatpush1.msra.mxu0 %v669
    %704 = vmatprep.subr.mxu0 %v672
    %705 = vmatpush1.msra.mxu0 %v671
    %706 = vmatprep.subr.mxu0 %v674
    %707 = vmatpush1.msra.mxu0 %v673
    %708 = vmatprep.subr.mxu0 %v676
    %709 = vmatpush1.msra.mxu0 %v675
    %710 = vmatprep.subr.mxu0 %v678
    %711 = vmatpush1.msra.mxu0 %v677
    %712 = vmatprep.subr.mxu0 %v680
    %713 = vmatpush1.msra.mxu0 %v679
    %714 = vmatprep.subr.mxu0 %v682
    %715 = vmatpush1.msra.mxu0 %v681
    %716 = vmatprep.subr.mxu0 %v684
    %717 = vmatpush1.msra.mxu0 %v683
    %718 = vmatprep.subr.mxu0 0.0
    %719 = vmatpush1.msra.mxu0 0.0
    %720 = vmatprep.subr.mxu0 0.0
    %721 = vmatpush1.msra.mxu0 0.0
    %722 = vmatprep.subr.mxu0 0.0
    %723 = vmatpush1.msra.mxu0 0.0
    %724 = vmatprep.subr.mxu0 0.0
    %725 = vmatpush1.msra.mxu0 0.0
    %726 = vmatprep.subr.mxu0 0.0
    %727 = vmatpush1.msra.mxu0 0.0
    %728 = vmatprep.subr.mxu0 0.0
    %729 = vmatpush1.msra.mxu0 0.0
    %730 = vmatprep.subr.mxu0 0.0
    %731 = vmatpush1.msra.mxu0 0.0
    %732 = vmatprep.subr.mxu0 0.0
    %733 = vmatpush1.msra.mxu0 0.0
    %734 = vmatprep.subr.mxu0 0.0
    %735 = vmatpush1.msra.mxu0 0.0
    %736 = vmatprep.subr.mxu0 0.0
    %737 = vmatpush1.msra.mxu0 0.0
    %738 = vmatprep.subr.mxu0 0.0
    %739 = vmatpush1.msra.mxu0 0.0
    %740 = vmatprep.subr.mxu0 0.0
    %741 = vmatpush1.msra.mxu0 0.0
    %742 = vmatprep.subr.mxu0 0.0
    %743 = vmatpush1.msra.mxu0 0.0
    %744 = vmatprep.subr.mxu0 0.0
    %745 = vmatpush1.msra.mxu0 0.0
    %746 = vmatprep.subr.mxu0 0.0
    %747 = vmatpush1.msra.mxu0 0.0
    %748 = vmatprep.subr.mxu0 0.0
    %749 = vmatpush1.msra.mxu0 0.0
    %750 = vmatprep.mubr.f32.mxu0 0.0
    %751 = vmatmul.mubr.f32.gmra.mrb[0].mxu0 %v685
    %v752 = vpop.f32.mrb[0].mxu0
    %v753 = vadd.f32 0.0, %v752
    %v754 = vpop.f32.mrb[0].mxu0
    %v755 = vadd.f32 0.0, %v754
    %756 = vdwg.mxu0
    %v757 = vxor.u32 %v753, 2147483648
    %v758 = vxor.u32 %v755, 2147483648
    %v759 = vmul.f32 %v757, 1.442695
    %v760 = vpow.pop %v759
    %v761 = vmul.f32 %v758, 1.442695
    %v762 = vpow.pop %v761
    %v763 = vadd.f32 %v760, 1.0
    %v764 = vadd.f32 %v762, 1.0
    %v765 = vrcp.pop %v763
    %v766 = vmul.f32 1.0, %v765
    %v767 = vrcp.pop %v764
    %v768 = vmul.f32 1.0, %v767
    %v771 = vcombine.low %v766, %v768
    %v773 = vunpack.c.l.s4 1966171168
    %v774 = vunpack.c.0.s8 %v773
    %v775 = vlaneseq
    %v776 = vshrl.u32 %v775, 7
    %v777 = vsub.s32 %v774, %v776
    %v778 = vrot.slane %v771, %v777
    %v780 = vunpack.c.l.s4 1966171168
    %v781 = vunpack.c.0.s8 %v780
    %v782 = vlaneseq
    %v783 = vshrl.u32 %v782, 7
    %v784 = vsub.s32 %v781, %v783
    %v785 = vrot.slane %v778, %v784
    %v787 = vlaneseq
    %vm788 = vcmp.ge.s32.totalorder %v787, 0
    %vm789 = vcmp.lt.s32.totalorder %v787, 256
    %vm790 = vmand %vm788, %vm789
    %791 = vst.msk [vmem:[#allocation2] sm:$0x3] %vm790, %v785
    // Predicated region
    $region26: #{tpu_custom_call.1} parent=1 // pred_check
      _
    $region27: #{tpu_custom_call.1} parent=1 // pred_check_branch
      %793 = sbr.rel (0) target = $region29
    $region28: #{tpu_custom_call.1} parent=1 // pred_region
      %s795 = ssub.s32 32, 32
      %796 = vsyncadd [#allocation3], %s795
      %s798 = sshll.u32 [#allocation2], 4
      %s799 = int_to_ptr.vmem [resolvable:$true] %s798
      %801 = dma.vmem_to_hbm [thread:$0]  %s799, 32, %s6, [#allocation3]
    $region29: #{tpu_custom_call.1} parent=1 // pred_fallthru
      _
    // Predicated region
    $region30: #{tpu_custom_call.1} parent=1 // pred_check
      _
    $region31: #{tpu_custom_call.1} parent=1 // pred_check_branch
      %803 = sbr.rel (0) target = $region33
    $region32: #{tpu_custom_call.1} parent=1 // pred_region
      %804 = dma.done [#allocation3], 32
    $region33: #{tpu_custom_call.1} parent=1 // pred_fallthru
      _
    %805 = vsyncpa [#allocation3], 1

</llo_original>
